<compile_context>
chip_gen: v7x
topology: tpu7x:2x2x1
jax: 0.10.0
libtpu: 0.0.40
codegen_flags: <defaults>
</compile_context>

<pallas_src>
import jax
import jax.numpy as jnp
from jax.experimental import pallas as pl
from jax.experimental.pallas import tpu as pltpu


def _round_up(n, m):
    return ((n + m - 1) // m) * m


def mlp_kernel(x_ref, w1_ref, b1_ref, w2_ref, b2_ref, o_ref):
    # Layer 1: (tm, K) @ (K, H) on the MXU, f32 accumulation; bias add + ReLU on the VPU.
    h = jnp.dot(x_ref[...], w1_ref[...], preferred_element_type=jnp.float32)
    h = jnp.maximum(h + b1_ref[...], 0.0)
    # Dropout: identity in eval/inference mode.
    # Layer 2 (H -> 1): VPU multiply against the (1, H) w2 row + lane reduction (XLU),
    # avoiding a wasted N=1 MXU pass and a lane-padded w2 tile.
    o = jnp.sum(h * w2_ref[...], axis=-1, keepdims=True) + b2_ref[0, 0]   # (tm, 1)
    # Lane-dense epilogue: store as (1, tm) so the writeback is unmasked vst.
    o_ref[...] = o.T.astype(o_ref.dtype)


def prepare_params(w1, b1, w2, b2, *, compute_dtype=jnp.float32):
    """Hoisted, once-per-model weight prep. w1:(K,H), b1:(H,), w2:(H,1), b2:(1,)."""
    K, H = w1.shape
    h_pad = _round_up(H, 128)
    w1_p = jnp.pad(w1, ((0, 0), (0, h_pad - H))).astype(compute_dtype)      # (K, h_pad)
    b1_row = jnp.pad(b1.reshape(1, H), ((0, 0), (0, h_pad - H)))             # (1, h_pad) f32
    b1_row = b1_row.astype(jnp.float32)
    w2_row = jnp.pad(w2.reshape(1, H), ((0, 0), (0, h_pad - H)))             # (1, h_pad) f32
    w2_row = w2_row.astype(jnp.float32)
    b2_sc = b2.reshape(1, 1).astype(jnp.float32)                             # (1, 1) SMEM
    return w1_p, b1_row, w2_row, b2_sc


def mlp_forward(x, params, *, block_m=2048):
    """x:(B,K) -> (B,1). params from prepare_params()."""
    w1_p, b1_row, w2_row, b2_sc = params
    B, K = x.shape
    Kw, h_pad = w1_p.shape
    assert Kw == K

    # ---- batch tiling: minimal padding, v7x-friendly split --------------------
    n_tiles = max(1, pl.cdiv(B, block_m))
    if B >= 1024:
        n_tiles = max(n_tiles, 2)          # v7x: give both TensorCores work
    tm = _round_up(pl.cdiv(B, n_tiles), 8)
    b_pad = n_tiles * tm
    x_in = x if b_pad == B else jnp.pad(x, ((0, b_pad - B), (0, 0)))
    if x_in.dtype != w1_p.dtype:
        x_in = x_in.astype(w1_p.dtype)     # opt-in bf16 storage/DMA/MXU path

    out = pl.pallas_call(
        mlp_kernel,
        out_shape=jax.ShapeDtypeStruct((n_tiles, tm), jnp.float32),
        grid=(n_tiles,),
        in_specs=[
            pl.BlockSpec((tm, K), lambda i: (i, 0)),        # x batch tile (K unpadded)
            pl.BlockSpec((K, h_pad), lambda i: (0, 0)),     # w1 (resident, 64 KiB)
            pl.BlockSpec((1, h_pad), lambda i: (0, 0)),     # b1 row
            pl.BlockSpec((1, h_pad), lambda i: (0, 0)),     # w2 as lane row
            pl.BlockSpec((1, 1), lambda i: (0, 0),
                         memory_space=pltpu.MemorySpace.SMEM),   # b2 scalar
        ],
        out_specs=pl.BlockSpec((1, tm), lambda i: (i, 0)),   # lane-dense per-tile row
        compiler_params=pltpu.CompilerParams(
            dimension_semantics=("parallel",)),
    )(x_in, w1_p, b1_row, w2_row, b2_sc)

    return out.reshape(-1)[:B].reshape(B, 1)


def reference_forward(x, w1, b1, w2, b2):
    h = jnp.maximum(x @ w1 + b1, 0.0)
    return h @ w2 + b2


if __name__ == "__main__":
    key = jax.random.PRNGKey(0)
    k_x, k_w1, k_b1, k_w2, k_b2, k_x2 = jax.random.split(key, 6)

    batch = 8
    input_dim = 100
    hidden = 128
    out_dim = 1

    # Deterministic synthetic parameters (shapes match nn.Linear(100,128), nn.Linear(128,1)).
    x = jax.random.normal(k_x, (batch, input_dim), dtype=jnp.float32)
    w1 = jax.random.normal(k_w1, (input_dim, hidden), dtype=jnp.float32) * 0.1
    b1 = jax.random.normal(k_b1, (hidden,), dtype=jnp.float32) * 0.1
    w2 = jax.random.normal(k_w2, (hidden, out_dim), dtype=jnp.float32) * 0.1
    b2 = jax.random.normal(k_b2, (out_dim,), dtype=jnp.float32) * 0.1

    # Weight prep hoisted: once per model, reused across forward calls.
    params = prepare_params(w1, b1, w2, b2)

    # Small-batch path (single grid step, no padding since 8 % 8 == 0).
    out = jax.block_until_ready(mlp_forward(x, params))
    ref = reference_forward(x, w1, b1, w2, b2)
    assert out.shape == (batch, out_dim)
    assert jnp.allclose(out, ref, atol=1e-4, rtol=1e-4)

    # Larger batch: exercises tiling arithmetic; 600 % 8 == 0 so no row padding at all.
    big_batch = 600
    x_big = jax.random.normal(k_x2, (big_batch, input_dim), dtype=jnp.float32)
    out_big = jax.block_until_ready(mlp_forward(x_big, params))
    ref_big = reference_forward(x_big, w1, b1, w2, b2)
    assert out_big.shape == (big_batch, out_dim)
    assert jnp.allclose(out_big, ref_big, atol=1e-4, rtol=1e-4)

    # Optional bf16 storage/DMA/MXU path (f32 accumulation + f32 epilogue).
    params_bf16 = prepare_params(w1, b1, w2, b2, compute_dtype=jnp.bfloat16)
    out_bf16 = jax.block_until_ready(mlp_forward(x_big, params_bf16))
    assert out_bf16.shape == (big_batch, out_dim)
    assert jnp.allclose(out_bf16, ref_big, atol=5e-2, rtol=5e-2)

    print("KERNEL_OK")
</pallas_src>

<mosaic_0001>
module attributes {stable_mosaic.version = 11 : i64} {
  func.func @mlp_kernel(%arg0: i32, %arg1: memref<8x100xf32, #tpu.memory_space<vmem>>, %arg2: memref<100x128xf32, #tpu.memory_space<vmem>>, %arg3: memref<1x128xf32, #tpu.memory_space<vmem>>, %arg4: memref<1x128xf32, #tpu.memory_space<vmem>>, %arg5: memref<1x1xf32, #tpu.memory_space<smem>>, %arg6: memref<1x8xf32, #tpu.memory_space<vmem>>) attributes {dimension_semantics = [#tpu.dimension_semantics<parallel>], iteration_bounds = array<i64: 1>, scalar_prefetch = 0 : i64, scratch_operands = 0 : i64, tpu.core_type = #tpu.core_type<tc>, window_params = [{transform_indices = @transform_0, window_bounds = array<i64: 8, 100>}, {pipeline_mode = #tpu.pipeline_mode<synchronous>, transform_indices = @transform_1, window_bounds = array<i64: 100, 128>}, {pipeline_mode = #tpu.pipeline_mode<synchronous>, transform_indices = @transform_2, window_bounds = array<i64: 1, 128>}, {pipeline_mode = #tpu.pipeline_mode<synchronous>, transform_indices = @transform_3, window_bounds = array<i64: 1, 128>}, {transform_indices = @transform_4, window_bounds = array<i64: 1, 1>}, {transform_indices = @transform_5, window_bounds = array<i64: 1, 8>}]} {
    %c0 = arith.constant 0 : index
    %c0_0 = arith.constant 0 : index
    %0 = vector.load %arg1[%c0, %c0_0] : memref<8x100xf32, #tpu.memory_space<vmem>>, vector<8x100xf32>
    %c0_1 = arith.constant 0 : index
    %c0_2 = arith.constant 0 : index
    %1 = vector.load %arg2[%c0_1, %c0_2] : memref<100x128xf32, #tpu.memory_space<vmem>>, vector<100x128xf32>
    %cst = arith.constant dense<0.000000e+00> : vector<8x128xf32>
    %2 = tpu.matmul %0, %1, %cst {dimension_numbers = #tpu.dot_dimension_numbers<[1], [0], [0], [1], [0, 0, 1, 1], [], []>} : vector<8x100xf32>, vector<100x128xf32>, vector<8x128xf32> -> vector<8x128xf32>
    %c0_3 = arith.constant 0 : index
    %c0_4 = arith.constant 0 : index
    %3 = vector.load %arg3[%c0_3, %c0_4] : memref<1x128xf32, #tpu.memory_space<vmem>>, vector<1x128xf32>
    %4 = vector.broadcast %3 : vector<1x128xf32> to vector<8x128xf32>
    %5 = arith.addf %2, %4 : vector<8x128xf32>
    %cst_5 = arith.constant 0.000000e+00 : f32
    %6 = vector.broadcast %cst_5 : f32 to vector<8x128xf32>
    %7 = arith.maximumf %5, %6 : vector<8x128xf32>
    %c0_6 = arith.constant 0 : index
    %c0_7 = arith.constant 0 : index
    %8 = vector.load %arg4[%c0_6, %c0_7] : memref<1x128xf32, #tpu.memory_space<vmem>>, vector<1x128xf32>
    %9 = vector.broadcast %8 : vector<1x128xf32> to vector<8x128xf32>
    %10 = arith.mulf %7, %9 : vector<8x128xf32>
    %cst_8 = arith.constant dense<0.000000e+00> : vector<8xf32>
    %11 = vector.multi_reduction <add>, %10, %cst_8 [1] : vector<8x128xf32> to vector<8xf32>
    %12 = vector.shape_cast %11 : vector<8xf32> to vector<8x1xf32>
    %c0_9 = arith.constant 0 : index
    %c0_10 = arith.constant 0 : index
    %13 = memref.load %arg5[%c0_9, %c0_10] : memref<1x1xf32, #tpu.memory_space<smem>>
    %14 = vector.broadcast %13 : f32 to vector<8x1xf32>
    %15 = arith.addf %12, %14 : vector<8x1xf32>
    %16 = tpu.transpose %15, [1, 0] : vector<8x1xf32> -> vector<1x8xf32>
    %c0_11 = arith.constant 0 : index
    %c0_12 = arith.constant 0 : index
    %17 = vector.load %arg6[%c0_11, %c0_12] : memref<1x8xf32, #tpu.memory_space<vmem>>, vector<1x8xf32>
    tpu.vector_store %arg6[%c0_11, %c0_12], %16 {strides = array<i32>} : memref<1x8xf32, #tpu.memory_space<vmem>>, vector<1x8xf32>,
    return
  }
  func.func @transform_0(%arg0: i32) -> (i32, i32) {
    %c0_i32 = arith.constant 0 : i32
    %c0_i32_0 = arith.constant 0 : i32
    return %arg0, %c0_i32 : i32, i32
  }
  func.func @transform_1(%arg0: i32) -> (i32, i32) {
    %c0_i32 = arith.constant 0 : i32
    %c0_i32_0 = arith.constant 0 : i32
    %c0_i32_1 = arith.constant 0 : i32
    return %c0_i32, %c0_i32_0 : i32, i32
  }
  func.func @transform_2(%arg0: i32) -> (i32, i32) {
    %c0_i32 = arith.constant 0 : i32
    %c0_i32_0 = arith.constant 0 : i32
    %c0_i32_1 = arith.constant 0 : i32
    return %c0_i32, %c0_i32_0 : i32, i32
  }
  func.func @transform_3(%arg0: i32) -> (i32, i32) {
    %c0_i32 = arith.constant 0 : i32
    %c0_i32_0 = arith.constant 0 : i32
    %c0_i32_1 = arith.constant 0 : i32
    return %c0_i32, %c0_i32_0 : i32, i32
  }
  func.func @transform_4(%arg0: i32) -> (i32, i32) {
    %c0_i32 = arith.constant 0 : i32
    %c0_i32_0 = arith.constant 0 : i32
    %c0_i32_1 = arith.constant 0 : i32
    return %c0_i32, %c0_i32_0 : i32, i32
  }
  func.func @transform_5(%arg0: i32) -> (i32, i32) {
    %c0_i32 = arith.constant 0 : i32
    %c0_i32_0 = arith.constant 0 : i32
    return %arg0, %c0_i32 : i32, i32
  }
}

</mosaic_0001>

<llo_original>
// kernel: tpu_custom_call.1
$region0: #{tpu_custom_call.1}
  #allocation0 [shape = 'u32[]', space=smem, size = 0x4, offset = 0x4, fixed_abs, tag = 'smem constant byte address 0x4 - core index']
  #allocation1 [shape = 'u32[144,128]{1,0:T(1,128)}', space=vmem, size = 0x12000, scoped, tag = 'internal scratch']
  #allocation2 [shape = 'f32[1,1]{1,0:T(1,128)S(6)}', space=smem, size = 0x200, scoped, tag = 'scoped memory for tpu_custom_call.1']
  %s0 = inlined_call_operand.hbm [shape: f32[8,100], index: 0, kind: input, shape index: {}]
  %s1 = inlined_call_operand.hbm [shape: f32[100,128], index: 1, kind: input, shape index: {}]
  %s2 = inlined_call_operand.vmem [shape: f32[1,128], index: 2, kind: input, shape index: {}]
  %s3 = inlined_call_operand.vmem [shape: f32[1,128], index: 3, kind: input, shape index: {}]
  %s4 = inlined_call_operand.<no memory space> [shape: f32[1,1], index: 4, kind: input, shape index: {}]
  %s5 = inlined_call_operand.hbm [shape: f32[1,8], index: 5, kind: output, shape index: {}]
  %s6 = sld [smem:[#allocation0]]
  $region38: #{tpu_custom_call.1} parent=0
    _
  %s8 = ssub.s32 1, %s6
  %s9 = scalar_select 0, %s8, %s6
  %10 = sst [smem:[#allocation2]] %s4
  $region1: #{tpu_custom_call.1} parent=0
    #allocation3 [shape = 'u8[4096]{0}', space=vmem, size = 0x1000, scoped, tag = 'input window, operand 0, single buffered']
    #allocation4 [shape = 's32[1]{0}', space=sflag, size = 0x4, scoped, tag = 'scoped memory for tpu_custom_call.1']
    #allocation5 [shape = 's32[1]{0}', space=sflag, size = 0x4, scoped, tag = 'scoped memory for tpu_custom_call.1']
    #allocation6 [shape = 'u8[53248]{0}', space=vmem, size = 0xd000, scoped, tag = 'input window, operand 1, single buffered']
    #allocation7 [shape = 's32[1]{0}', space=sflag, size = 0x4, scoped, tag = 'scoped memory for tpu_custom_call.1']
    #allocation8 [shape = 'u8[512]{0}', space=vmem, size = 0x400, scoped, tag = 'output window, operand 0, single buffered']
    %11 = vsyncpa [#allocation4], 0
    %12 = vsyncpa [#allocation7], 0
    %13 = vsyncpa [#allocation5], 0
    // Predicated region
    $region2: #{tpu_custom_call.1} parent=1 // pred_check
      _
    $region3: #{tpu_custom_call.1} parent=1 // pred_check_branch
      %15 = sbr.rel (0) target = $region5
    $region4: #{tpu_custom_call.1} parent=1 // pred_region
      %s17 = ssub.s32 128, 128
      %18 = vsyncadd [#allocation4], %s17
      %s20 = sshll.u32 [#allocation3], 4
      %s21 = int_to_ptr.vmem [resolvable:$true] %s20
      %23 = dma.hbm_to_vmem [thread:$0]  %s0, 128, %s21, [#allocation4]
    $region5: #{tpu_custom_call.1} parent=1 // pred_fallthru
      _
    // Predicated region
    $region6: #{tpu_custom_call.1} parent=1 // pred_check
      _
    $region7: #{tpu_custom_call.1} parent=1 // pred_check_branch
      %25 = sbr.rel (0) target = $region9
    $region8: #{tpu_custom_call.1} parent=1 // pred_region
      %s27 = ssub.s32 1664, 1664
      %28 = vsyncadd [#allocation7], %s27
      %s29 = sshll.u32 [#allocation6], 4
      %s30 = int_to_ptr.vmem [resolvable:$true] %s29
      %35 = dma.hbm_to_vmem [thread:$0]  %s1, 1664, %s30, [#allocation7], 128, 128, 8
    $region9: #{tpu_custom_call.1} parent=1 // pred_fallthru
      _
    // Predicated region
    $region10: #{tpu_custom_call.1} parent=1 // pred_check
      _
    $region11: #{tpu_custom_call.1} parent=1 // pred_check_branch
      %37 = sbr.rel (0) target = $region13
    $region12: #{tpu_custom_call.1} parent=1 // pred_region
      _
    $region13: #{tpu_custom_call.1} parent=1 // pred_fallthru
      _
    // Predicated region
    $region14: #{tpu_custom_call.1} parent=1 // pred_check
      _
    $region15: #{tpu_custom_call.1} parent=1 // pred_check_branch
      %39 = sbr.rel (0) target = $region17
    $region16: #{tpu_custom_call.1} parent=1 // pred_region
      _
    $region17: #{tpu_custom_call.1} parent=1 // pred_fallthru
      _
    // Predicated region
    $region18: #{tpu_custom_call.1} parent=1 // pred_check
      _
    $region19: #{tpu_custom_call.1} parent=1 // pred_check_branch
      %41 = sbr.rel (0) target = $region21
    $region20: #{tpu_custom_call.1} parent=1 // pred_region
      _
    $region21: #{tpu_custom_call.1} parent=1 // pred_fallthru
      _
    // Predicated region
    $region22: #{tpu_custom_call.1} parent=1 // pred_check
      _
    $region23: #{tpu_custom_call.1} parent=1 // pred_check_branch
      %43 = sbr.rel (0) target = $region25
    $region24: #{tpu_custom_call.1} parent=1 // pred_region
      %44 = dma.done [#allocation4], 128
    $region25: #{tpu_custom_call.1} parent=1 // pred_fallthru
      _
    // Predicated region
    $region26: #{tpu_custom_call.1} parent=1 // pred_check
      _
    $region27: #{tpu_custom_call.1} parent=1 // pred_check_branch
      %46 = sbr.rel (0) target = $region29
    $region28: #{tpu_custom_call.1} parent=1 // pred_region
      %47 = dma.done [#allocation7], 1664
    $region29: #{tpu_custom_call.1} parent=1 // pred_fallthru
      _
    %v48 = vld [vmem:[#allocation3] sm:$0xff]
    %v49 = vld [vmem:[#allocation6] sm:$0xff]
    %v50 = vld [vmem:[#allocation6 + $0x8] sm:$0xff]
    %v51 = vld [vmem:[#allocation6 + $0x10] sm:$0xff]
    %v52 = vld [vmem:[#allocation6 + $0x18] sm:$0xff]
    %v53 = vld [vmem:[#allocation6 + $0x20] sm:$0xff]
    %v54 = vld [vmem:[#allocation6 + $0x28] sm:$0xff]
    %v55 = vld [vmem:[#allocation6 + $0x30] sm:$0xff]
    %v56 = vld [vmem:[#allocation6 + $0x38] sm:$0xff]
    %v57 = vld [vmem:[#allocation6 + $0x40] sm:$0xff]
    %v58 = vld [vmem:[#allocation6 + $0x48] sm:$0xff]
    %v59 = vld [vmem:[#allocation6 + $0x50] sm:$0xff]
    %v60 = vld [vmem:[#allocation6 + $0x58] sm:$0xff]
    %v61 = vld [vmem:[#allocation6 + $0x60] sm:$0xf]
    %v62 = vld [vmem:[%s2] sm:$0x1]
    %v64 = vlaneseq
    %v65 = vshrl.u32 %v64, 7
    %v66 = vsub.s32 0, %v65
    %v67 = vrot.slane %v62, %v66
    %vm69 = vcmask 818176
    %v71 = vsel %vm69, %v48, 0
    %vm73 = vcmask 1043456
    %v75 = vsel %vm73, %v61, 0
    %77 = vmatprep.subr.mxu0 0.0
    %78 = vmatpush1.msra.mxu0 %v49
    %79 = vmatprep.subr.mxu0 0.0
    %80 = vmatpush1.msra.mxu0 %v50
    %81 = vmatprep.subr.mxu0 0.0
    %82 = vmatpush1.msra.mxu0 %v51
    %83 = vmatprep.subr.mxu0 0.0
    %84 = vmatpush1.msra.mxu0 %v52
    %85 = vmatprep.subr.mxu0 0.0
    %86 = vmatpush1.msra.mxu0 %v53
    %87 = vmatprep.subr.mxu0 0.0
    %88 = vmatpush1.msra.mxu0 %v54
    %89 = vmatprep.subr.mxu0 0.0
    %90 = vmatpush1.msra.mxu0 %v55
    %91 = vmatprep.subr.mxu0 0.0
    %92 = vmatpush1.msra.mxu0 %v56
    %93 = vmatprep.subr.mxu0 0.0
    %94 = vmatpush1.msra.mxu0 %v57
    %95 = vmatprep.subr.mxu0 0.0
    %96 = vmatpush1.msra.mxu0 %v58
    %97 = vmatprep.subr.mxu0 0.0
    %98 = vmatpush1.msra.mxu0 %v59
    %99 = vmatprep.subr.mxu0 0.0
    %100 = vmatpush1.msra.mxu0 %v60
    %101 = vmatprep.subr.mxu0 0.0
    %102 = vmatpush1.msra.mxu0 %v75
    %103 = vmatprep.subr.mxu0 0.0
    %104 = vmatpush1.msra.mxu0 0.0
    %105 = vmatprep.subr.mxu0 0.0
    %106 = vmatpush1.msra.mxu0 0.0
    %107 = vmatprep.subr.mxu0 0.0
    %108 = vmatpush1.msra.mxu0 0.0
    %109 = vmatprep.subr.mxu0 0.0
    %110 = vmatpush1.msra.mxu0 0.0
    %111 = vmatprep.subr.mxu0 0.0
    %112 = vmatpush1.msra.mxu0 0.0
    %113 = vmatprep.subr.mxu0 0.0
    %114 = vmatpush1.msra.mxu0 0.0
    %115 = vmatprep.subr.mxu0 0.0
    %116 = vmatpush1.msra.mxu0 0.0
    %117 = vmatprep.subr.mxu0 0.0
    %118 = vmatpush1.msra.mxu0 0.0
    %119 = vmatprep.subr.mxu0 0.0
    %120 = vmatpush1.msra.mxu0 0.0
    %121 = vmatprep.subr.mxu0 0.0
    %122 = vmatpush1.msra.mxu0 0.0
    %123 = vmatprep.subr.mxu0 0.0
    %124 = vmatpush1.msra.mxu0 0.0
    %125 = vmatprep.subr.mxu0 0.0
    %126 = vmatpush1.msra.mxu0 0.0
    %127 = vmatprep.subr.mxu0 0.0
    %128 = vmatpush1.msra.mxu0 0.0
    %129 = vmatprep.subr.mxu0 0.0
    %130 = vmatpush1.msra.mxu0 0.0
    %131 = vmatprep.subr.mxu0 0.0
    %132 = vmatpush1.msra.mxu0 0.0
    %133 = vmatprep.subr.mxu0 0.0
    %134 = vmatpush1.msra.mxu0 0.0
    %135 = vmatprep.subr.mxu0 0.0
    %136 = vmatpush1.msra.mxu0 0.0
    %137 = vmatprep.subr.mxu0 0.0
    %138 = vmatpush1.msra.mxu0 0.0
    %139 = vmatprep.subr.mxu0 0.0
    %140 = vmatpush1.msra.mxu0 0.0
    %141 = vmatprep.mubr.f32.mxu0 0.0
    %142 = vmatmul.mubr.f32.gmra.mrb[0].mxu0 %v71
    %v143 = vpop.f32.mrb[0].mxu0
    %v144 = vadd.f32 %v67, %v143
    %v145 = vpop.f32.mrb[0].mxu0
    %146 = vdwg.mxu0
    %v147 = vmax.f32 %v144, 0.0
    %v148 = vld [vmem:[%s3] sm:$0x1]
    %v150 = vlaneseq
    %v151 = vshrl.u32 %v150, 7
    %v152 = vsub.s32 0, %v151
    %v153 = vrot.slane %v148, %v152
    %v155 = vmul.f32 %v147, %v153
    %156 = vadd.xlane.f32.xlu0 %v155
    %v157 = vpop.xlane.xlu0 %156
    %s158 = sld [smem:[#allocation2]]
    %v159 = vstv %s158
    %v160 = vadd.f32 %v157, %v159
    %161 = vxpose.xlu0.b32.start [1/16] %v160, 128
    %162 = vxpose.xlu0.b32.cont [2/16] 0.0, 128
    %163 = vxpose.xlu0.b32.cont [3/16] 0.0, 128
    %164 = vxpose.xlu0.b32.cont [4/16] 0.0, 128
    %165 = vxpose.xlu0.b32.cont [5/16] 0.0, 128
    %166 = vxpose.xlu0.b32.cont [6/16] 0.0, 128
    %167 = vxpose.xlu0.b32.cont [7/16] 0.0, 128
    %168 = vxpose.xlu0.b32.cont [8/16] 0.0, 128
    %169 = vxpose.xlu0.b32.cont [9/16] 0.0, 128
    %170 = vxpose.xlu0.b32.cont [10/16] 0.0, 128
    %171 = vxpose.xlu0.b32.cont [11/16] 0.0, 128
    %172 = vxpose.xlu0.b32.cont [12/16] 0.0, 128
    %173 = vxpose.xlu0.b32.cont [13/16] 0.0, 128
    %174 = vxpose.xlu0.b32.cont [14/16] 0.0, 128
    %175 = vxpose.xlu0.b32.cont [15/16] 0.0, 128
    %176 = vxpose.xlu0.b32.end [16/16] 0.0, 128
    %v177 = vpop.trf.xlu0
    %v178 = vpop.trf.xlu0
    %v179 = vpop.trf.xlu0
    %v180 = vpop.trf.xlu0
    %v181 = vpop.trf.xlu0
    %v182 = vpop.trf.xlu0
    %v183 = vpop.trf.xlu0
    %v184 = vpop.trf.xlu0
    %v185 = vpop.trf.xlu0
    %v186 = vpop.trf.xlu0
    %v187 = vpop.trf.xlu0
    %v188 = vpop.trf.xlu0
    %v189 = vpop.trf.xlu0
    %v190 = vpop.trf.xlu0
    %v191 = vpop.trf.xlu0
    %v192 = vpop.trf.xlu0
    %vm193 = vcmask 57344
    %194 = vst.msk [vmem:[#allocation8] sm:$0x1] %vm193, %v177
    // Predicated region
    $region30: #{tpu_custom_call.1} parent=1 // pred_check
      _
    $region31: #{tpu_custom_call.1} parent=1 // pred_check_branch
      %196 = sbr.rel (0) target = $region33
    $region32: #{tpu_custom_call.1} parent=1 // pred_region
      %s198 = ssub.s32 16, 16
      %199 = vsyncadd [#allocation5], %s198
      %s201 = sshll.u32 [#allocation8], 4
      %s202 = int_to_ptr.vmem [resolvable:$true] %s201
      %204 = dma.vmem_to_hbm [thread:$0]  %s202, 16, %s5, [#allocation5]
    $region33: #{tpu_custom_call.1} parent=1 // pred_fallthru
      _
    // Predicated region
    $region34: #{tpu_custom_call.1} parent=1 // pred_check
      _
    $region35: #{tpu_custom_call.1} parent=1 // pred_check_branch
      %206 = sbr.rel (0) target = $region37
    $region36: #{tpu_custom_call.1} parent=1 // pred_region
      %207 = dma.done [#allocation5], 16
    $region37: #{tpu_custom_call.1} parent=1 // pred_fallthru
      _
    %208 = vsyncpa [#allocation4], 1
    %209 = vsyncpa [#allocation7], 1
    %210 = vsyncpa [#allocation5], 1

</llo_original>
